<compile_context>
chip_gen: v7x
topology: tpu7x:2x2x1
jax: 0.10.0
libtpu: 0.0.40
codegen_flags: <defaults>
</compile_context>

<pallas_src>
import math
import numpy as np
import jax
import jax.numpy as jnp
from jax.experimental import pallas as pl
from jax.experimental.pallas import tpu as pltpu

# ------------------------------- hyperparameters ------------------------------
MODEL_DIM = 128      # lane-dense (multiple of 128)
MAX_SEQ_LEN = 16
SEQ_LEN = 8
BATCH = 2
DROPOUT_P = 0.1      # unused at eval time (identity)


# ---------------------------------- kernel ------------------------------------
def pe_add_kernel(x_ref, pe_ref, o_ref):
    """o = x + pe  (pe broadcast over the batch dim).

    x_ref : (B, S, D) block
    pe_ref: (1, S, D) block (first S rows of the (1, max_seq_len, D) buffer)
    """
    o_ref[...] = x_ref[...] + pe_ref[...]


# --------------------------------- wrapper -------------------------------------
def positional_encoding_forward(x, pe):
    """Pallas equivalent of PositionalEncoding.forward (eval mode)."""
    B, S, D = x.shape
    return pl.pallas_call(
        pe_add_kernel,
        out_shape=jax.ShapeDtypeStruct((B, S, D), x.dtype),
        grid=(1,),  # single grid step: everything fits trivially in VMEM
        in_specs=[
            pl.BlockSpec((B, S, D), lambda i: (0, 0, 0)),   # whole activation slab
            pl.BlockSpec((1, S, D), lambda i: (0, 0, 0)),   # == pe[:, :S, :]
        ],
        out_specs=pl.BlockSpec((B, S, D), lambda i: (0, 0, 0)),
        compiler_params=pltpu.CompilerParams(
            dimension_semantics=("arbitrary",)),
    )(x, pe)


# ------------------------- positional-encoding buffer --------------------------
def make_positional_encoding(max_seq_len, model_dim):
    """Same formula / layout as the PyTorch register_buffer ('pe', (1, L, D))."""
    pe = np.zeros((max_seq_len, model_dim), np.float32)
    position = np.arange(max_seq_len, dtype=np.float32)[:, None]
    div_term = np.exp(np.arange(0, model_dim, 2, dtype=np.float32)
                      * -(math.log(10000.0) / model_dim))
    pe[:, 0::2] = np.sin(position * div_term)
    pe[:, 1::2] = np.cos(position * div_term)
    return jnp.asarray(pe[None, :, :])   # (1, max_seq_len, model_dim)


# ----------------------------------- main --------------------------------------
if __name__ == "__main__":
    key = jax.random.PRNGKey(0)
    x = jax.random.normal(key, (BATCH, SEQ_LEN, MODEL_DIM), jnp.float32)
    pe = make_positional_encoding(MAX_SEQ_LEN, MODEL_DIM)

    fwd = jax.jit(positional_encoding_forward)
    out = jax.block_until_ready(fwd(x, pe))

    # reference: X + pe[:, :S, :] (dropout is identity in eval mode)
    ref = x + pe[:, :SEQ_LEN, :]

    assert out.shape == (BATCH, SEQ_LEN, MODEL_DIM), out.shape
    assert bool(jnp.isfinite(out).all())
    assert bool(jnp.allclose(out, ref, atol=1e-6, rtol=1e-6))
    print("KERNEL_OK")
</pallas_src>

<mosaic_0001>
module attributes {stable_mosaic.version = 11 : i64} {
  func.func @pe_add_kernel(%arg0: i32, %arg1: memref<2x8x128xf32, #tpu.memory_space<vmem>>, %arg2: memref<1x8x128xf32, #tpu.memory_space<vmem>>, %arg3: memref<2x8x128xf32, #tpu.memory_space<vmem>>) attributes {dimension_semantics = [#tpu.dimension_semantics<arbitrary>], iteration_bounds = array<i64: 1>, scalar_prefetch = 0 : i64, scratch_operands = 0 : i64, tpu.core_type = #tpu.core_type<tc>, window_params = [{pipeline_mode = #tpu.pipeline_mode<synchronous>, transform_indices = @transform_0, window_bounds = array<i64: 2, 8, 128>}, {transform_indices = @transform_1, window_bounds = array<i64: 1, 8, 128>}, {pipeline_mode = #tpu.pipeline_mode<synchronous>, transform_indices = @transform_2, window_bounds = array<i64: 2, 8, 128>}]} {
    %c0 = arith.constant 0 : index
    %c0_0 = arith.constant 0 : index
    %c0_1 = arith.constant 0 : index
    %0 = vector.load %arg1[%c0, %c0_0, %c0_1] : memref<2x8x128xf32, #tpu.memory_space<vmem>>, vector<2x8x128xf32>
    %c0_2 = arith.constant 0 : index
    %c0_3 = arith.constant 0 : index
    %c0_4 = arith.constant 0 : index
    %1 = vector.load %arg2[%c0_2, %c0_3, %c0_4] : memref<1x8x128xf32, #tpu.memory_space<vmem>>, vector<1x8x128xf32>
    %2 = vector.broadcast %1 : vector<1x8x128xf32> to vector<2x8x128xf32>
    %3 = arith.addf %0, %2 : vector<2x8x128xf32>
    %c0_5 = arith.constant 0 : index
    %c0_6 = arith.constant 0 : index
    %c0_7 = arith.constant 0 : index
    %4 = vector.load %arg3[%c0_5, %c0_6, %c0_7] : memref<2x8x128xf32, #tpu.memory_space<vmem>>, vector<2x8x128xf32>
    tpu.vector_store %arg3[%c0_5, %c0_6, %c0_7], %3 {strides = array<i32>} : memref<2x8x128xf32, #tpu.memory_space<vmem>>, vector<2x8x128xf32>,
    return
  }
  func.func @transform_0(%arg0: i32) -> (i32, i32, i32) {
    %c0_i32 = arith.constant 0 : i32
    %c0_i32_0 = arith.constant 0 : i32
    %c0_i32_1 = arith.constant 0 : i32
    %c0_i32_2 = arith.constant 0 : i32
    return %c0_i32, %c0_i32_0, %c0_i32_1 : i32, i32, i32
  }
  func.func @transform_1(%arg0: i32) -> (i32, i32, i32) {
    %c0_i32 = arith.constant 0 : i32
    %c0_i32_0 = arith.constant 0 : i32
    %c0_i32_1 = arith.constant 0 : i32
    %c0_i32_2 = arith.constant 0 : i32
    return %c0_i32, %c0_i32_0, %c0_i32_1 : i32, i32, i32
  }
  func.func @transform_2(%arg0: i32) -> (i32, i32, i32) {
    %c0_i32 = arith.constant 0 : i32
    %c0_i32_0 = arith.constant 0 : i32
    %c0_i32_1 = arith.constant 0 : i32
    %c0_i32_2 = arith.constant 0 : i32
    return %c0_i32, %c0_i32_0, %c0_i32_1 : i32, i32, i32
  }
}

</mosaic_0001>

<llo_original>
// kernel: positional_encoding_forward.1
$region0: #{positional_encoding_forward.1}
  #allocation0 [shape = 'u32[]', space=smem, size = 0x4, offset = 0x4, fixed_abs, tag = 'smem constant byte address 0x4 - core index']
  #allocation1 [shape = 'u32[144,128]{1,0:T(1,128)}', space=vmem, size = 0x12000, scoped, tag = 'internal scratch']
  %s0 = inlined_call_operand.hbm [shape: f32[2,8,128], index: 0, kind: input, shape index: {}]
  %s1 = inlined_call_operand.hbm [shape: f32[1,16,128], index: 1, kind: input, shape index: {}]
  %s2 = inlined_call_operand.hbm [shape: f32[2,8,128], index: 2, kind: output, shape index: {}]
  %s3 = sld [smem:[#allocation0]]
  $region26: #{positional_encoding_forward.1} parent=0
    _
  %s5 = ssub.s32 1, %s3
  %s6 = scalar_select 0, %s5, %s3
  $region1: #{positional_encoding_forward.1} parent=0
    #allocation2 [shape = 'u8[8192]{0}', space=vmem, size = 0x2000, scoped, tag = 'input window, operand 0, single buffered']
    #allocation3 [shape = 's32[1]{0}', space=sflag, size = 0x4, scoped, tag = 'scoped memory for positional_encoding_forward.1']
    #allocation4 [shape = 's32[1]{0}', space=sflag, size = 0x4, scoped, tag = 'scoped memory for positional_encoding_forward.1']
    #allocation5 [shape = 'u8[4096]{0}', space=vmem, size = 0x1000, scoped, tag = 'input window, operand 1, single buffered']
    #allocation6 [shape = 's32[1]{0}', space=sflag, size = 0x4, scoped, tag = 'scoped memory for positional_encoding_forward.1']
    #allocation7 [shape = 'u8[8192]{0}', space=vmem, size = 0x2000, scoped, tag = 'output window, operand 0, single buffered']
    %7 = vsyncpa [#allocation3], 0
    %8 = vsyncpa [#allocation6], 0
    %9 = vsyncpa [#allocation4], 0
    // Predicated region
    $region2: #{positional_encoding_forward.1} parent=1 // pred_check
      _
    $region3: #{positional_encoding_forward.1} parent=1 // pred_check_branch
      %11 = sbr.rel (0) target = $region5
    $region4: #{positional_encoding_forward.1} parent=1 // pred_region
      %s13 = ssub.s32 256, 256
      %14 = vsyncadd [#allocation3], %s13
      %s15 = sshll.u32 [#allocation2], 4
      %s16 = int_to_ptr.vmem [resolvable:$true] %s15
      %21 = dma.hbm_to_vmem [thread:$0]  %s0, 256, %s16, [#allocation3], 128, 128, 8
    $region5: #{positional_encoding_forward.1} parent=1 // pred_fallthru
      _
    // Predicated region
    $region6: #{positional_encoding_forward.1} parent=1 // pred_check
      _
    $region7: #{positional_encoding_forward.1} parent=1 // pred_check_branch
      %23 = sbr.rel (0) target = $region9
    $region8: #{positional_encoding_forward.1} parent=1 // pred_region
      %s25 = ssub.s32 128, 128
      %26 = vsyncadd [#allocation6], %s25
      %s28 = sshll.u32 [#allocation5], 4
      %s29 = int_to_ptr.vmem [resolvable:$true] %s28
      %31 = dma.hbm_to_vmem [thread:$0]  %s1, 128, %s29, [#allocation6]
    $region9: #{positional_encoding_forward.1} parent=1 // pred_fallthru
      _
    // Predicated region
    $region10: #{positional_encoding_forward.1} parent=1 // pred_check
      _
    $region11: #{positional_encoding_forward.1} parent=1 // pred_check_branch
      %33 = sbr.rel (0) target = $region13
    $region12: #{positional_encoding_forward.1} parent=1 // pred_region
      %34 = dma.done [#allocation3], 256
    $region13: #{positional_encoding_forward.1} parent=1 // pred_fallthru
      _
    // Predicated region
    $region14: #{positional_encoding_forward.1} parent=1 // pred_check
      _
    $region15: #{positional_encoding_forward.1} parent=1 // pred_check_branch
      %36 = sbr.rel (0) target = $region17
    $region16: #{positional_encoding_forward.1} parent=1 // pred_region
      %37 = dma.done [#allocation6], 128
    $region17: #{positional_encoding_forward.1} parent=1 // pred_fallthru
      _
    %v38 = vld [vmem:[#allocation2] sm:$0xff]
    %v39 = vld [vmem:[#allocation2 + $0x8] sm:$0xff]
    %v40 = vld [vmem:[#allocation5] sm:$0xff]
    %v41 = vadd.f32 %v38, %v40
    %v42 = vadd.f32 %v39, %v40
    %43 = vst [vmem:[#allocation7] sm:$0xff] %v41
    %44 = vst [vmem:[#allocation7 + $0x8] sm:$0xff] %v42
    // Predicated region
    $region18: #{positional_encoding_forward.1} parent=1 // pred_check
      _
    $region19: #{positional_encoding_forward.1} parent=1 // pred_check_branch
      %46 = sbr.rel (0) target = $region21
    $region20: #{positional_encoding_forward.1} parent=1 // pred_region
      %s48 = ssub.s32 256, 256
      %49 = vsyncadd [#allocation4], %s48
      %s50 = sshll.u32 [#allocation7], 4
      %s51 = int_to_ptr.vmem [resolvable:$true] %s50
      %56 = dma.vmem_to_hbm [thread:$0]  %s51, 256, %s2, [#allocation4], 128, 128, 8
    $region21: #{positional_encoding_forward.1} parent=1 // pred_fallthru
      _
    // Predicated region
    $region22: #{positional_encoding_forward.1} parent=1 // pred_check
      _
    $region23: #{positional_encoding_forward.1} parent=1 // pred_check_branch
      %58 = sbr.rel (0) target = $region25
    $region24: #{positional_encoding_forward.1} parent=1 // pred_region
      %59 = dma.done [#allocation4], 256
    $region25: #{positional_encoding_forward.1} parent=1 // pred_fallthru
      _
    %60 = vsyncpa [#allocation3], 1
    %61 = vsyncpa [#allocation6], 1
    %62 = vsyncpa [#allocation4], 1

</llo_original>
